<compile_context>
chip_gen: v6e
topology: v6e:2x2x1
jax: 0.10.0
libtpu: 0.0.40
codegen_flags: <defaults>
</compile_context>

<pallas_src>
import jax
import jax.numpy as jnp
from jax.experimental import pallas as pl
from jax.experimental.pallas import tpu as pltpu

ALPHA_DEFAULT = 10


def _row_tile(c, hw_rows, elem_bytes, target_bytes=4 << 20):
    """Pick (t_sub, hw_rows_padded): sublane-row tile and padded row count."""
    if hw_rows <= 8:
        # block last-two-dims equal the full array dims -> allowed, no padding
        return hw_rows, hw_rows
    hw_rows_p = ((hw_rows + 7) // 8) * 8
    max_rows = max(8, target_bytes // (c * 128 * elem_bytes))
    best = 8
    for t in range(8, hw_rows_p + 1, 8):          # multiple-of-8 divisors only
        if hw_rows_p % t == 0 and t <= max_rows:
            best = t
    return best, hw_rows_p


def l_max(x, alpha=ALPHA_DEFAULT):
    n, c, h, w = x.shape
    hw = h * w
    out_dtype = x.dtype
    elem_bytes = jnp.dtype(x.dtype).itemsize

    hw_rows = pl.cdiv(hw, 128)
    t_sub, hw_rows_p = _row_tile(c, hw_rows, elem_bytes)
    hw_p = hw_rows_p * 128
    n_sp = hw_rows_p // t_sub

    # ---- lane-dense (N, C, rows, 128) layout, edge-replicated spatial pad ----
    x_flat = x.reshape(n, c, hw)
    if hw_p != hw:
        # padded lanes hold real data values -> global min/max unaffected;
        # padded output columns are discarded below.
        x_flat = jnp.pad(x_flat, ((0, 0), (0, 0), (0, hw_p - hw)), mode="edge")
    x4 = x_flat.reshape(n, c, hw_rows_p, 128)

    # ------------------ Pass 1: tiled global min / max reduce -----------------
    def minmax_kernel(x_ref, min_ref, max_ref, mn_sc, mx_sc):
        first = (pl.program_id(0) == 0) & (pl.program_id(1) == 0)
        last = ((pl.program_id(0) == pl.num_programs(0) - 1)
                & (pl.program_id(1) == pl.num_programs(1) - 1))
        xt = x_ref[...].astype(jnp.float32)
        tmin = jnp.min(xt)
        tmax = jnp.max(xt)

        @pl.when(first)
        def _():
            mn_sc[0] = tmin
            mx_sc[0] = tmax

        @pl.when(jnp.logical_not(first))
        def _():
            mn_sc[0] = jnp.minimum(mn_sc[0], tmin)
            mx_sc[0] = jnp.maximum(mx_sc[0], tmax)

        @pl.when(last)
        def _():
            min_ref[0, 0] = mn_sc[0]
            max_ref[0, 0] = mx_sc[0]

    xmin, xmax = pl.pallas_call(
        minmax_kernel,
        out_shape=(jax.ShapeDtypeStruct((1, 1), jnp.float32),
                   jax.ShapeDtypeStruct((1, 1), jnp.float32)),
        grid=(n, n_sp),
        in_specs=[pl.BlockSpec((1, c, t_sub, 128), lambda b, s: (b, 0, s, 0))],
        out_specs=(
            pl.BlockSpec((1, 1), lambda b, s: (0, 0), memory_space=pltpu.SMEM),
            pl.BlockSpec((1, 1), lambda b, s: (0, 0), memory_space=pltpu.SMEM),
        ),
        scratch_shapes=[pltpu.SMEM((1,), jnp.float32),
                        pltpu.SMEM((1,), jnp.float32)],
        compiler_params=pltpu.CompilerParams(
            dimension_semantics=("arbitrary", "arbitrary")),
    )(x4)

    # ----------- Pass 2: normalize + powers + channel-axis reduction ----------
    def lmax_kernel(min_ref, max_ref, x_ref, o_ref):
        xmin_s = min_ref[0, 0]
        inv_range = 1.0 / (max_ref[0, 0] - xmin_s)     # hoisted scalar reciprocal
        xf = x_ref[...].astype(jnp.float32)            # (1, C, t_sub, 128)
        xn = (xf - xmin_s) * inv_range
        p_a = xn ** alpha                              # x^alpha  (VPU, integer pow)
        num = jnp.sum(p_a * xn, axis=1)                # sum x^(a+1) over C
        den = jnp.sum(p_a, axis=1)                     # sum x^a     over C
        o_ref[...] = (num / den).astype(o_ref.dtype)   # exact div (accuracy)

    out4 = pl.pallas_call(
        lmax_kernel,
        out_shape=jax.ShapeDtypeStruct((n, hw_rows_p, 128), out_dtype),
        grid=(n, n_sp),
        in_specs=[
            pl.BlockSpec((1, 1), lambda b, s: (0, 0), memory_space=pltpu.SMEM),
            pl.BlockSpec((1, 1), lambda b, s: (0, 0), memory_space=pltpu.SMEM),
            pl.BlockSpec((1, c, t_sub, 128), lambda b, s: (b, 0, s, 0)),
        ],
        out_specs=pl.BlockSpec((1, t_sub, 128), lambda b, s: (b, s, 0)),
        compiler_params=pltpu.CompilerParams(
            dimension_semantics=("parallel", "parallel")),
    )(xmin, xmax, x4)

    return out4.reshape(n, hw_p)[:, :hw].reshape(n, h, w)


# --------------------------------- reference ----------------------------------
def l_max_ref(x, alpha=ALPHA_DEFAULT):
    xn = (x - jnp.min(x)) / (jnp.max(x) - jnp.min(x))
    return jnp.sum(xn ** (alpha + 1), axis=1) / jnp.sum(xn ** alpha, axis=1)


if __name__ == "__main__":
    key = jax.random.PRNGKey(0)
    # Small NCHW input consistent with the module's conv-style usage.
    x = jax.random.normal(key, (2, 4, 16, 16), dtype=jnp.float32)

    out = l_max(x)
    out = jax.block_until_ready(out)

    ref = l_max_ref(x)
    assert out.shape == (2, 16, 16), out.shape
    assert jnp.allclose(out, ref, atol=1e-5, rtol=1e-5), (
        float(jnp.max(jnp.abs(out - ref)))
    )
    print("KERNEL_OK")
</pallas_src>

<mosaic_0001>
module attributes {stable_mosaic.version = 11 : i64} {
  func.func @minmax_kernel(%arg0: i32, %arg1: i32, %arg2: memref<1x4x2x128xf32, #tpu.memory_space<vmem>>, %arg3: memref<1x1xf32, #tpu.memory_space<smem>>, %arg4: memref<1x1xf32, #tpu.memory_space<smem>>, %arg5: memref<1xf32, #tpu.memory_space<smem>>, %arg6: memref<1xf32, #tpu.memory_space<smem>>) attributes {dimension_semantics = [#tpu.dimension_semantics<arbitrary>, #tpu.dimension_semantics<arbitrary>], iteration_bounds = array<i64: 2, 1>, scalar_prefetch = 0 : i64, scratch_operands = 2 : i64, tpu.core_type = #tpu.core_type<tc>, window_params = [{transform_indices = @transform_0, window_bounds = array<i64: 1, 4, 2, 128>}, {transform_indices = @transform_1, window_bounds = array<i64: 1, 1>}, {transform_indices = @transform_2, window_bounds = array<i64: 1, 1>}]} {
    %c0_i32 = arith.constant 0 : i32
    %0 = arith.cmpi eq, %arg0, %c0_i32 : i32
    %c0_i32_0 = arith.constant 0 : i32
    %1 = arith.cmpi eq, %arg1, %c0_i32_0 : i32
    %2 = arith.andi %0, %1 : i1
    %c1_i32 = arith.constant 1 : i32
    %3 = arith.cmpi eq, %arg0, %c1_i32 : i32
    %c0_i32_1 = arith.constant 0 : i32
    %4 = arith.cmpi eq, %arg1, %c0_i32_1 : i32
    %5 = arith.andi %3, %4 : i1
    %c0 = arith.constant 0 : index
    %c0_2 = arith.constant 0 : index
    %c0_3 = arith.constant 0 : index
    %c0_4 = arith.constant 0 : index
    %6 = vector.load %arg2[%c0, %c0_2, %c0_3, %c0_4] : memref<1x4x2x128xf32, #tpu.memory_space<vmem>>, vector<1x4x2x128xf32>
    %7 = vector.shape_cast %6 : vector<1x4x2x128xf32> to vector<1x1x4x2x128xf32>
    %cst = arith.constant dense<0x7F800000> : vector<1xf32>
    %8 = vector.multi_reduction <minimumf>, %7, %cst [1, 2, 3, 4] : vector<1x1x4x2x128xf32> to vector<1xf32>
    %9 = vector.shape_cast %8 : vector<1xf32> to vector<1x1x1x1x1xf32>
    %10 = vector.extract %9[0, 0, 0, 0, 0] : f32 from vector<1x1x1x1x1xf32>
    %11 = vector.shape_cast %6 : vector<1x4x2x128xf32> to vector<1x1x4x2x128xf32>
    %cst_5 = arith.constant dense<0xFF800000> : vector<1xf32>
    %12 = vector.multi_reduction <maximumf>, %11, %cst_5 [1, 2, 3, 4] : vector<1x1x4x2x128xf32> to vector<1xf32>
    %13 = vector.shape_cast %12 : vector<1xf32> to vector<1x1x1x1x1xf32>
    %14 = vector.extract %13[0, 0, 0, 0, 0] : f32 from vector<1x1x1x1x1xf32>
    %15 = arith.extui %2 : i1 to i32
    %c0_i32_6 = arith.constant 0 : i32
    %16 = arith.cmpi ne, %15, %c0_i32_6 : i32
    scf.if %16 {
      %c0_9 = arith.constant 0 : index
      %22 = memref.load %arg5[%c0_9] : memref<1xf32, #tpu.memory_space<smem>>
      memref.store %10, %arg5[%c0_9] : memref<1xf32, #tpu.memory_space<smem>>
      %c0_10 = arith.constant 0 : index
      %23 = memref.load %arg6[%c0_10] : memref<1xf32, #tpu.memory_space<smem>>
      memref.store %14, %arg6[%c0_10] : memref<1xf32, #tpu.memory_space<smem>>
    } else {
    }
    %true = arith.constant true
    %17 = arith.xori %2, %true : i1
    %18 = arith.extui %17 : i1 to i32
    %c0_i32_7 = arith.constant 0 : i32
    %19 = arith.cmpi ne, %18, %c0_i32_7 : i32
    scf.if %19 {
      %c0_9 = arith.constant 0 : index
      %22 = memref.load %arg5[%c0_9] : memref<1xf32, #tpu.memory_space<smem>>
      %23 = arith.minimumf %22, %10 : f32
      %c0_10 = arith.constant 0 : index
      %24 = memref.load %arg5[%c0_10] : memref<1xf32, #tpu.memory_space<smem>>
      memref.store %23, %arg5[%c0_10] : memref<1xf32, #tpu.memory_space<smem>>
      %c0_11 = arith.constant 0 : index
      %25 = memref.load %arg6[%c0_11] : memref<1xf32, #tpu.memory_space<smem>>
      %26 = arith.maximumf %25, %14 : f32
      %c0_12 = arith.constant 0 : index
      %27 = memref.load %arg6[%c0_12] : memref<1xf32, #tpu.memory_space<smem>>
      memref.store %26, %arg6[%c0_12] : memref<1xf32, #tpu.memory_space<smem>>
    } else {
    }
    %20 = arith.extui %5 : i1 to i32
    %c0_i32_8 = arith.constant 0 : i32
    %21 = arith.cmpi ne, %20, %c0_i32_8 : i32
    scf.if %21 {
      %c0_9 = arith.constant 0 : index
      %22 = memref.load %arg5[%c0_9] : memref<1xf32, #tpu.memory_space<smem>>
      %c0_10 = arith.constant 0 : index
      %c0_11 = arith.constant 0 : index
      %23 = memref.load %arg3[%c0_10, %c0_11] : memref<1x1xf32, #tpu.memory_space<smem>>
      memref.store %22, %arg3[%c0_10, %c0_11] : memref<1x1xf32, #tpu.memory_space<smem>>
      %c0_12 = arith.constant 0 : index
      %24 = memref.load %arg6[%c0_12] : memref<1xf32, #tpu.memory_space<smem>>
      %c0_13 = arith.constant 0 : index
      %c0_14 = arith.constant 0 : index
      %25 = memref.load %arg4[%c0_13, %c0_14] : memref<1x1xf32, #tpu.memory_space<smem>>
      memref.store %24, %arg4[%c0_13, %c0_14] : memref<1x1xf32, #tpu.memory_space<smem>>
    } else {
    }
    return
  }
  func.func @transform_0(%arg0: i32, %arg1: i32) -> (i32, i32, i32, i32) {
    %c0_i32 = arith.constant 0 : i32
    %c0_i32_0 = arith.constant 0 : i32
    %c0_i32_1 = arith.constant 0 : i32
    return %arg0, %c0_i32, %arg1, %c0_i32_0 : i32, i32, i32, i32
  }
  func.func @transform_1(%arg0: i32, %arg1: i32) -> (i32, i32) {
    %c0_i32 = arith.constant 0 : i32
    %c0_i32_0 = arith.constant 0 : i32
    %c0_i32_1 = arith.constant 0 : i32
    return %c0_i32, %c0_i32_0 : i32, i32
  }
  func.func @transform_2(%arg0: i32, %arg1: i32) -> (i32, i32) {
    %c0_i32 = arith.constant 0 : i32
    %c0_i32_0 = arith.constant 0 : i32
    %c0_i32_1 = arith.constant 0 : i32
    return %c0_i32, %c0_i32_0 : i32, i32
  }
}

</mosaic_0001>

<llo_original>
// kernel: tpu_custom_call.1
$region0: #{tpu_custom_call.1}
  #allocation0 [shape = 'u32[]', space=smem, size = 0x4, offset = 0x4, fixed_abs, tag = 'smem constant byte address 0x4 - core index']
  #allocation1 [shape = 'u32[144,128]{1,0:T(1,128)}', space=vmem, size = 0x12000, scoped, tag = 'internal scratch']
  #allocation2 [shape = 'f32[1]{0:T(128)}', space=smem, size = 0x200, scoped, tag = 'scratch operand']
  #allocation3 [shape = 'f32[1]{0:T(128)}', space=smem, size = 0x200, scoped, tag = 'scratch operand']
  %s0 = inlined_call_operand.hbm [shape: f32[2,4,2,128], index: 0, kind: input, shape index: {}]
  %s1 = inlined_call_operand.hbm [shape: f32[1,1], index: 1, kind: output, shape index: {0}]
  %s2 = inlined_call_operand.hbm [shape: f32[1,1], index: 2, kind: output, shape index: {1}]
  %3 = xla_tuple %s1, %s2
  %s4 = sld [smem:[#allocation0]]
  $region61: #{tpu_custom_call.1} parent=0
    _
  %s6 = ssub.s32 1, %s4
  %s7 = scalar_select 0, %s6, %s4
  $region1: #{tpu_custom_call.1} parent=0
    #allocation4 [shape = 'u8[8192]{0}', space=vmem, size = 0x2000, scoped, tag = 'input window, operand 0']
    #allocation5 [shape = 's32[2]{0}', space=sflag, size = 0x8, scoped, tag = 'scoped memory for tpu_custom_call.1']
    #allocation6 [shape = 's32[2]{0}', space=sflag, size = 0x8, scoped, tag = 'scoped memory for tpu_custom_call.1']
    #allocation7 [shape = 'u8[512]{0}', space=smem, size = 0x200, scoped, tag = 'output window, operand 0, single buffered']
    #allocation8 [shape = 'u8[512]{0}', space=smem, size = 0x200, scoped, tag = 'output window, operand 1, single buffered']
    #allocation9 [shape = 's32[1]{0}', space=sflag, size = 0x4, scoped, tag = 'scoped memory for tpu_custom_call.1']
    %8 = vsyncpa [#allocation5], 0
    %s9 = scalar_lea.sflag [#allocation5], 1
    %10 = vsyncpa %s9, 0
    %11 = vsyncpa [#allocation6], 0
    %12 = vsyncpa [#allocation9], 0
    loop: start=0, step=1, limit=4
    $region2: #{tpu_custom_call.1} parent=1 // loop_pre_header
      _
    $region3: #{tpu_custom_call.1} parent=1 // loop_header
      %s14 = sphi 0, %s18
      %p15 = scmp.ge.s32.totalorder %s14, 4
      %s21 = sphi 0, %s33
      %s22 = sphi 0, %s29
      %s23 = sphi 0, %s21
      %s24 = sphi 0, %s22
      %s25 = sphi 0, %s23
      %s26 = sphi 0, %s24
      %s38 = sphi 0, %s40
      %s41 = sphi 0, %s38
      %s42 = sphi 0, %s41
      %s58 = sphi 0, %s42
      %s62 = sphi 0, %s62
      %s64 = sphi 0, %s62
      %s65 = sphi 0, %s64
      %s79 = sphi 0, %s65
      %s83 = sphi 0, %s83
      %s85 = sphi 0, %s83
      %s86 = sphi 0, %s85
      %s100 = sphi 0, %s86
    $region4: #{tpu_custom_call.1} parent=1 // loop_header_branch
      %17 = sbr.rel (%p15) target = $region8
    $region5: #{tpu_custom_call.1} parent=1 // loop_body
      %s19 = ssub.s32 %s14, 1
      %s20 = ssub.s32 %s14, 2
      %s27 = sadd.s32 1, %s22
      %p28 = scmp.ge.s32.totalorder %s27, 1
      %s29 = scalar_select %p28, 0, %s27
      %s30 = sadd.s32 1, %s21
      %s31 = scalar_select %p28, %s30, %s21
      %p32 = scmp.ge.s32.totalorder %s31, 2
      %s33 = scalar_select %p32, 0, %s31
      %s34 = ssub.s32 %s21, %s33
      %s35 = ssub.s32 %s22, %s29
      %s36 = sor.u32 %s34, %s35
      %p37 = scmp.eq.s32.totalorder %s36, 0
      %s39 = sadd.s32 %s38, 1
      %s40 = scalar_select %p37, %s38, %s39
      %p43 = pneg %p37
      %p44 = scmp.eq.s32.totalorder %s14, 1
      %p45 = por %p43, %p44
      %p46 = scmp.ne.s32.totalorder %s38, %s41
      %p47 = scmp.eq.s32.totalorder %s14, 0
      %p48 = por %p46, %p47
      %p49 = scmp.ne.s32.totalorder %s38, %s41
      %p50 = scmp.eq.s32.totalorder %s19, 1
      %p51 = por %p49, %p50
      %p52 = scmp.ne.s32.totalorder %s41, %s42
      %p53 = scmp.eq.s32.totalorder %s19, 0
      %p54 = por %p52, %p53
      %p55 = scmp.ne.s32.totalorder %s41, %s42
      %p56 = scmp.eq.s32.totalorder %s20, 1
      %p57 = por %p55, %p56
      %p59 = scmp.ne.s32.totalorder %s42, %s58
      %p60 = scmp.eq.s32.totalorder %s20, 0
      %p61 = por %p59, %p60
      %s63 = sadd.s32 %s62, 1
      %p66 = scmp.eq.s32.totalorder %s14, 1
      %p67 = scmp.ne.s32.totalorder %s62, %s64
      %p68 = scmp.eq.s32.totalorder %s14, 0
      %p69 = por %p67, %p68
      %p70 = scmp.ne.s32.totalorder %s62, %s64
      %p71 = scmp.eq.s32.totalorder %s19, 1
      %p72 = por %p70, %p71
      %p73 = scmp.ne.s32.totalorder %s64, %s65
      %p74 = scmp.eq.s32.totalorder %s19, 0
      %p75 = por %p73, %p74
      %p76 = scmp.ne.s32.totalorder %s64, %s65
      %p77 = scmp.eq.s32.totalorder %s20, 1
      %p78 = por %p76, %p77
      %p80 = scmp.ne.s32.totalorder %s65, %s79
      %p81 = scmp.eq.s32.totalorder %s20, 0
      %p82 = por %p80, %p81
      %s84 = sadd.s32 %s83, 1
      %p87 = scmp.eq.s32.totalorder %s14, 1
      %p88 = scmp.ne.s32.totalorder %s83, %s85
      %p89 = scmp.eq.s32.totalorder %s14, 0
      %p90 = por %p88, %p89
      %p91 = scmp.ne.s32.totalorder %s83, %s85
      %p92 = scmp.eq.s32.totalorder %s19, 1
      %p93 = por %p91, %p92
      %p94 = scmp.ne.s32.totalorder %s85, %s86
      %p95 = scmp.eq.s32.totalorder %s19, 0
      %p96 = por %p94, %p95
      %p97 = scmp.ne.s32.totalorder %s85, %s86
      %p98 = scmp.eq.s32.totalorder %s20, 1
      %p99 = por %p97, %p98
      %p101 = scmp.ne.s32.totalorder %s86, %s100
      %p102 = scmp.eq.s32.totalorder %s20, 0
      %p103 = por %p101, %p102
      %p104 = scmp.le.s32.totalorder 1, %s14
      %p105 = scmp.lt.s32.totalorder %s14, 3
      %p106 = pnand %p104, %p105
      %p107 = pneg %p106
      // Predicated region
      $region9: #{tpu_custom_call.1} parent=5 // pred_check
        _
      $region10: #{tpu_custom_call.1} parent=5 // pred_check_branch
        %109 = sbr.rel (%p106) target = $region12
      $region11: #{tpu_custom_call.1} parent=5 // pred_region
        %s110 = ssub.s32 %s14, 1
      $region12: #{tpu_custom_call.1} parent=5 // pred_fallthru
        _
      %p111 = scmp.lt.s32.totalorder %s14, 2
      // Predicated region
      $region13: #{tpu_custom_call.1} parent=5 // pred_check
        %p112 = pneg %p111
      $region14: #{tpu_custom_call.1} parent=5 // pred_check_branch
        %114 = sbr.rel (%p112) target = $region16
      $region15: #{tpu_custom_call.1} parent=5 // pred_region
        // Predicated region
        $region17: #{tpu_custom_call.1} parent=15 // pred_check
          %p115 = pneg %p48
        $region18: #{tpu_custom_call.1} parent=15 // pred_check_branch
          %117 = sbr.rel (%p115) target = $region20
        $region19: #{tpu_custom_call.1} parent=15 // pred_region
          %s118 = sand.u32 %s38, 1
          %s119 = scalar_lea.sflag [#allocation5], %s118
          %s120 = sand.u32 %s38, 1
          %s121 = smul.addr %s120, 8
          %s122 = scalar_lea.vmem [#allocation4], %s121
          %s124 = ssub.s32 128, 128
          %125 = vsyncadd %s119, %s124
          %s126 = smul.addr %s21, 4
          %s127 = sadd.s32 %s22, %s126
          %s128 = smul.addr %s127, 32
          %s129 = scalar_lea.hbm %s0, %s128
          %s130 = sshll.u32 %s122, 4
          %s131 = int_to_ptr.vmem [resolvable:$true] %s130
          %136 = dma.hbm_to_vmem [thread:$0]  %s129, 128, %s131, %s119, 32, 32, 2
        $region20: #{tpu_custom_call.1} parent=15 // pred_fallthru
          _
      $region16: #{tpu_custom_call.1} parent=5 // pred_fallthru
        _
      %p137 = scmp.le.s32.totalorder 1, %s14
      %p138 = scmp.lt.s32.totalorder %s14, 3
      %p139 = pnand %p137, %p138
      %p140 = pneg %p139
      // Predicated region
      $region21: #{tpu_custom_call.1} parent=5 // pred_check
        _
      $region22: #{tpu_custom_call.1} parent=5 // pred_check_branch
        %142 = sbr.rel (%p139) target = $region24
      $region23: #{tpu_custom_call.1} parent=5 // pred_region
        %s143 = ssub.s32 %s14, 1
        %s144 = sand.u32 %s41, 1
        %s145 = scalar_lea.sflag [#allocation5], %s144
        %s146 = sand.u32 %s41, 1
        %s147 = smul.addr %s146, 8
        %s148 = scalar_lea.vmem [#allocation4], %s147
        // Predicated region
        $region25: #{tpu_custom_call.1} parent=23 // pred_check
          %p149 = pneg %p54
        $region26: #{tpu_custom_call.1} parent=23 // pred_check_branch
          %151 = sbr.rel (%p149) target = $region28
        $region27: #{tpu_custom_call.1} parent=23 // pred_region
          %152 = dma.done %s145, 128
        $region28: #{tpu_custom_call.1} parent=23 // pred_fallthru
          _
        %s153 = sand.u32 %s41, 1
        %s154 = scalar_lea.sflag [#allocation5], %s153
        %s155 = sand.u32 %s41, 1
        %s156 = smul.addr %s155, 8
        %s157 = scalar_lea.vmem [#allocation4], %s156
        %p158 = pneg %p54
        %p159 = pneg %p51
        %p160 = pneg %p75
        %p161 = pneg %p72
        %p162 = pneg %p96
        %p163 = pneg %p93
        %p164 = scmp.eq.s32.totalorder %s23, 0
        %p165 = scmp.eq.s32.totalorder %s24, 0
        %p166 = pnand %p164, %p165
        %p167 = pneg %p166
        %p168 = scmp.eq.s32.totalorder %s23, 1
        %p169 = pnand %p168, %p165
        %p170 = pneg %p169
        %v171 = vld [vmem:[%s148] sm:$0x3]
        %v172 = vld [vmem:[%s148 + $0x2] sm:$0x3]
        %v173 = vld [vmem:[%s148 + $0x4] sm:$0x3]
        %v174 = vld [vmem:[%s148 + $0x6] sm:$0x3]
        %vm175 = vcmask 1041408
        %v176 = vsel %vm175, %v171, inf
        %v177 = vsel %vm175, %v172, inf
        %v178 = vsel %vm175, %v173, inf
        %v179 = vsel %vm175, %v174, inf
        %v180 = vmin.f32 %v176, %v177
        %v181 = vmin.f32 %v178, %v179
        %v182 = vmin.f32 %v180, %v181
        %183 = vmin.xlane.f32.xlu0 %v182
        %v184 = vpop.xlane.xlu0 %183
        %v185 = vrot.slane %v184, 4
        %v186 = vmin.f32 %v184, %v185
        %v187 = vrot.slane %v186, 2
        %v188 = vmin.f32 %v186, %v187
        %v189 = vrot.slane %v188, 1
        %v190 = vmin.f32 %v188, %v189
        %s191 = vtos %v190
        %v192 = vsel %vm175, %v171, -inf
        %v193 = vsel %vm175, %v172, -inf
        %v194 = vsel %vm175, %v173, -inf
        %v195 = vsel %vm175, %v174, -inf
        %v196 = vmax.f32 %v192, %v193
        %v197 = vmax.f32 %v194, %v195
        %v198 = vmax.f32 %v196, %v197
        %199 = vmax.xlane.f32.xlu0 %v198
        %v200 = vpop.xlane.xlu0 %199
        %v201 = vrot.slane %v200, 4
        %v202 = vmax.f32 %v200, %v201
        %v203 = vrot.slane %v202, 2
        %v204 = vmax.f32 %v202, %v203
        %v205 = vrot.slane %v204, 1
        %v206 = vmax.f32 %v204, %v205
        %s207 = vtos %v206
        // Predicated region
        $region29: #{tpu_custom_call.1} parent=23 // pred_check
          _
        $region30: #{tpu_custom_call.1} parent=23 // pred_check_branch
          %209 = sbr.rel (%p166) target = $region32
        $region31: #{tpu_custom_call.1} parent=23 // pred_region
          %s210 = scalar_lea.smem [#allocation2], 0
          %211 = sst [smem:[%s210]] %s191
          %s212 = scalar_lea.smem [#allocation3], 0
          %213 = sst [smem:[%s212]] %s207
        $region32: #{tpu_custom_call.1} parent=23 // pred_fallthru
          _
        %p214 = pneg %p167
        // Predicated region
        $region33: #{tpu_custom_call.1} parent=23 // pred_check
          _
        $region34: #{tpu_custom_call.1} parent=23 // pred_check_branch
          %216 = sbr.rel (%p167) target = $region36
        $region35: #{tpu_custom_call.1} parent=23 // pred_region
          %s217 = sld [smem:[#allocation2]]
          %s218 = smin.f32 %s217, %s191
          %s219 = scalar_lea.smem [#allocation2], 0
          %220 = sst [smem:[%s219]] %s218
          %s221 = sld [smem:[#allocation3]]
          %s222 = smax.f32 %s221, %s207
          %s223 = scalar_lea.smem [#allocation3], 0
          %224 = sst [smem:[%s223]] %s222
        $region36: #{tpu_custom_call.1} parent=23 // pred_fallthru
          _
        // Predicated region
        $region37: #{tpu_custom_call.1} parent=23 // pred_check
          _
        $region38: #{tpu_custom_call.1} parent=23 // pred_check_branch
          %226 = sbr.rel (%p169) target = $region40
        $region39: #{tpu_custom_call.1} parent=23 // pred_region
          %s227 = sld [smem:[#allocation2]]
          %s228 = scalar_lea.smem [#allocation7], 0
          %229 = sst [smem:[%s228]] %s227
          %s230 = sld [smem:[#allocation3]]
          %s231 = scalar_lea.smem [#allocation8], 0
          %232 = sst [smem:[%s231]] %s230
        $region40: #{tpu_custom_call.1} parent=23 // pred_fallthru
          _
        // Predicated region
        $region41: #{tpu_custom_call.1} parent=23 // pred_check
          %p233 = pneg %p72
        $region42: #{tpu_custom_call.1} parent=23 // pred_check_branch
          %235 = sbr.rel (%p233) target = $region44
        $region43: #{tpu_custom_call.1} parent=23 // pred_region
          %s237 = ssub.s32 16, 16
          %238 = vsyncadd [#allocation6], %s237
          %241 = dma.smem_to_hbm [#allocation7], 16, %s1, [#allocation6]
        $region44: #{tpu_custom_call.1} parent=23 // pred_fallthru
          _
        // Predicated region
        $region45: #{tpu_custom_call.1} parent=23 // pred_check
          %p242 = pneg %p93
        $region46: #{tpu_custom_call.1} parent=23 // pred_check_branch
          %244 = sbr.rel (%p242) target = $region48
        $region47: #{tpu_custom_call.1} parent=23 // pred_region
          %s246 = ssub.s32 16, 16
          %247 = vsyncadd [#allocation9], %s246
          %250 = dma.smem_to_hbm [#allocation8], 16, %s2, [#allocation9]
        $region48: #{tpu_custom_call.1} parent=23 // pred_fallthru
          _
        // Predicated region
        $region49: #{tpu_custom_call.1} parent=23 // pred_check
          %p251 = pneg %p72
        $region50: #{tpu_custom_call.1} parent=23 // pred_check_branch
          %253 = sbr.rel (%p251) target = $region52
        $region51: #{tpu_custom_call.1} parent=23 // pred_region
          %254 = dma.done [#allocation6], 16
        $region52: #{tpu_custom_call.1} parent=23 // pred_fallthru
          _
        // Predicated region
        $region53: #{tpu_custom_call.1} parent=23 // pred_check
          %p255 = pneg %p93
        $region54: #{tpu_custom_call.1} parent=23 // pred_check_branch
          %257 = sbr.rel (%p255) target = $region56
        $region55: #{tpu_custom_call.1} parent=23 // pred_region
          %258 = dma.done [#allocation9], 16
        $region56: #{tpu_custom_call.1} parent=23 // pred_fallthru
          _
        %259 = sfence
      $region24: #{tpu_custom_call.1} parent=5 // pred_fallthru
        _
      %p260 = scmp.le.s32.totalorder 2, %s14
      // Predicated region
      $region57: #{tpu_custom_call.1} parent=5 // pred_check
        %p261 = pneg %p260
      $region58: #{tpu_custom_call.1} parent=5 // pred_check_branch
        %263 = sbr.rel (%p261) target = $region60
      $region59: #{tpu_custom_call.1} parent=5 // pred_region
        %s264 = ssub.s32 %s14, 2
      $region60: #{tpu_custom_call.1} parent=5 // pred_fallthru
        _
    $region6: #{tpu_custom_call.1} parent=1 // loop_footer
      %s18 = sadd.s32 1, %s14
    $region7: #{tpu_custom_call.1} parent=1 // loop_footer_branch
      %13 = sbr.rel target = $region3
    $region8: #{tpu_custom_call.1} parent=1 // loop_exit
      _
    %265 = vsyncpa [#allocation5], 1
    %s266 = scalar_lea.sflag [#allocation5], 1
    %267 = vsyncpa %s266, 1
    %268 = vsyncpa [#allocation6], 1
    %s269 = scalar_lea.sflag [#allocation6], 1
    %270 = vsyncpa %s269, 1
    %271 = vsyncpa [#allocation9], 1

</llo_original>
